<compile_context>
chip_gen: v6e
topology: v6e:2x2x1
jax: 0.10.0
libtpu: 0.0.40
codegen_flags: <defaults>
</compile_context>

<pallas_src>
import functools

import jax
import jax.numpy as jnp
from jax.experimental import pallas as pl
from jax.experimental.pallas import tpu as pltpu


def _sincere_kernel(temperature, group_size, compute_dtype,
                    q_ref, emb_ref, lrow_ref, lcol_ref, invc_ref, o_ref):
    """One query-row block: (TM, Dp) x (B, Dp)^T -> per-row partial loss (TM, 1)."""
    tm = lrow_ref.shape[0]
    b = lcol_ref.shape[1]

    # Fold 1/T into the small row operand: O(TM*D) muls instead of O(TM*B).
    inv_t = jnp.float32(1.0 / temperature)
    q = (q_ref[...].astype(jnp.float32) * inv_t).astype(compute_dtype)   # (TM, Dp)

    # logits[r, c] = <e_r, e_c> / T  -- MXU matmul, f32 accumulation.
    l = jax.lax.dot_general(
        q, emb_ref[...], (((1,), (1,)), ((), ())),
        preferred_element_type=jnp.float32)                              # (TM, B)

    # Masks rebuilt in-kernel from labels (no O(B^2) mask traffic).
    same = lrow_ref[...] == lcol_ref[...]                                # (TM, B)
    if group_size is None:
        excl = same          # excluded from the denominator sum
        numer = same         # contributes to the numerator
    else:
        row0 = pl.program_id(0) * tm
        ridx = row0 + jax.lax.broadcasted_iota(jnp.int32, (tm, b), 0)
        cidx = jax.lax.broadcasted_iota(jnp.int32, (tm, b), 1)
        blockm = (ridx < group_size) == (cidx < group_size)
        excl = jnp.logical_or(same, blockm)
        numer = jnp.logical_and(same, jnp.logical_not(blockm))

    # torch reduces dim=0 (columns); logits (Gram) and excl are both symmetric
    # here, so the row-wise (axis=1) reduction below is equivalent.  Any
    # asymmetric mask or non-Gram logits would break this equivalence.
    neg_inf = jnp.float32(-jnp.inf)
    masked = jnp.where(excl, neg_inf, l)
    m = jnp.max(masked, axis=1, keepdims=True)                           # (TM, 1)
    m_safe = jnp.where(m == neg_inf, jnp.float32(0.0), m)

    # Fused logsumexp + logaddexp: E is reused for the denominator sum and for
    # log_denom = m + log(E + s)  (1 exp + 1 log per element).  Safe for
    # L2-normalized embeddings at T = 0.07: max exponent ~ 2/T ~ 28.6 << f32 max.
    ex = jnp.exp(l - m_safe)                                             # (TM, B)
    s = jnp.sum(jnp.where(excl, jnp.float32(0.0), ex), axis=1, keepdims=True)
    ce = (m_safe + jnp.log(ex + s)) - l                                  # (TM, B)

    # Weight by numerator mask * 1/count(column) (precomputed) and reduce per
    # row -- no B^2 divides, and empty rows/columns contribute exactly 0.
    w = jnp.where(numer, invc_ref[...], jnp.float32(0.0))                # (TM, B)
    o_ref[...] = jnp.sum(w * ce, axis=1, keepdims=True)                  # (TM, 1)


def _pick_block_rows(batch):
    for tm in (256, 128, 64, 32, 16, 8):
        if batch % tm == 0:
            return tm
    return batch        # odd batch: single row block (full-extent block is legal)


def sincere_loss(embeds, labels, temperature=0.07, group_size=None,
                 compute_dtype=jnp.bfloat16, block_rows=None):
    """SINCERE loss.  embeds: (B, D) L2-normalized, labels: (B,) ints -> scalar."""
    B, D = embeds.shape
    tm = _pick_block_rows(B) if block_rows is None else int(block_rows)
    assert B % tm == 0, "block_rows must divide the batch size"

    # Pad the feature dim to a lane-dense multiple of 128 (zero pad keeps the
    # dot products exact) and cast to the MXU compute dtype (bf16 by default).
    dp = ((D + 127) // 128) * 128
    emb32 = embeds.astype(jnp.float32)
    if dp != D:
        emb32 = jnp.pad(emb32, ((0, 0), (0, dp - D)))
    emb = emb32.astype(compute_dtype)

    labels = labels.astype(jnp.int32)
    lrow = labels.reshape(B, 1)
    lcol = labels.reshape(1, B)

    # Per-column numerator counts: tiny JAX glue (XLA fuses the compare+reduce;
    # nothing O(B^2) is shipped to the kernel).  `numer` is symmetric, so the
    # column counts also serve as the row counts used for the empty-row clamp.
    same = labels[None, :] == labels[:, None]
    if group_size is None:
        numer = same
    else:
        in_first = jnp.arange(B) < group_size
        blockm = in_first[:, None] == in_first[None, :]
        numer = jnp.logical_and(same, jnp.logical_not(blockm))
    count = jnp.sum(numer, axis=0).astype(jnp.float32)
    inv_count = jnp.where(count > 0, 1.0 / jnp.maximum(count, 1.0),
                          jnp.float32(0.0)).reshape(1, B)

    # Raise the scoped VMEM limit explicitly (defaults are 16/32 MiB) with a
    # rough estimate of the working set; capped at 64 MiB (v7x physical).
    itemsize = jnp.dtype(compute_dtype).itemsize
    vmem_est = (2 * B * dp * itemsize + 4 * tm * dp * itemsize
                + 8 * tm * B * 4 + 16 * B + (2 << 20))
    vmem_limit = int(min(max(vmem_est, 16 << 20), 64 << 20))

    kernel = functools.partial(
        _sincere_kernel, float(temperature),
        None if group_size is None else int(group_size), compute_dtype)

    partial_rows = pl.pallas_call(
        kernel,
        out_shape=jax.ShapeDtypeStruct((B, 1), jnp.float32),
        grid=(B // tm,),
        in_specs=[
            pl.BlockSpec((tm, dp), lambda i: (i, 0)),   # query-row block of embeds
            pl.BlockSpec((B, dp), lambda i: (0, 0)),    # key side: resident, DMA'd once
            pl.BlockSpec((tm, 1), lambda i: (i, 0)),    # labels of the row block
            pl.BlockSpec((1, B), lambda i: (0, 0)),     # labels of all columns
            pl.BlockSpec((1, B), lambda i: (0, 0)),     # 1/count per column
        ],
        out_specs=pl.BlockSpec((tm, 1), lambda i: (i, 0)),
        compiler_params=pltpu.CompilerParams(
            dimension_semantics=("parallel",),          # v7x: row blocks across 2 TCs
            vmem_limit_bytes=vmem_limit),
    )(emb, emb, lrow, lcol, inv_count)

    return jnp.sum(partial_rows) / jnp.float32(B)


def _sincere_ref(embeds, labels, temperature=0.07, group_size=None):
    """Pure-JAX mirror of the PyTorch SINCERELoss.forward (both group paths)."""
    B = embeds.shape[0]
    logits = (embeds @ embeds.T) / temperature
    same = labels[None, :] == labels[:, None]
    if group_size is None:
        excl = same
        numer = same
    else:
        in_first = jnp.arange(B) < group_size
        blockm = in_first[:, None] == in_first[None, :]
        excl = jnp.logical_or(same, blockm)
        numer = jnp.logical_and(same, jnp.logical_not(blockm))
    denom = jnp.where(excl, -jnp.inf, logits)
    base = jax.scipy.special.logsumexp(denom, axis=0)        # (B,)
    log_denom = jnp.logaddexp(logits, base[:, None])
    ce = jnp.where(numer, log_denom - logits, 0.0)
    count = jnp.sum(numer, axis=0)
    ce = jnp.where(count[:, None] == 0, 0.0, ce)
    safe = jnp.where(count == 0, 1, count)
    return jnp.sum(ce / safe) / B


if __name__ == "__main__":
    key = jax.random.PRNGKey(0)
    k1, k2 = jax.random.split(key)
    B, D = 8, 32
    x = jax.random.normal(k1, (B, D), dtype=jnp.float32)
    embeds = x / jnp.linalg.norm(x, axis=1, keepdims=True)   # normalized over D
    labels = jax.random.randint(k2, (B,), 0, 4, dtype=jnp.int32)

    # f32 MXU path: checks the mask / logsumexp / reduction math (tolerance
    # leaves room for the MXU's internal f32-pass decomposition).
    for gs in (None, 4):
        got = jax.block_until_ready(
            sincere_loss(embeds, labels, 0.07, group_size=gs,
                         compute_dtype=jnp.float32))
        ref = _sincere_ref(embeds, labels, 0.07, group_size=gs)
        assert jnp.allclose(got, ref, rtol=2e-2, atol=2e-2), (gs, float(got), float(ref))

    # bf16 MXU path (default / fast): looser tolerance for bf16 quantization.
    for gs in (None, 4):
        got = jax.block_until_ready(
            sincere_loss(embeds, labels, 0.07, group_size=gs,
                         compute_dtype=jnp.bfloat16))
        ref = _sincere_ref(embeds, labels, 0.07, group_size=gs)
        assert jnp.allclose(got, ref, rtol=5e-2, atol=5e-2), (gs, float(got), float(ref))

    print("KERNEL_OK")
</pallas_src>

<mosaic_0001>
module attributes {stable_mosaic.version = 11 : i64} {
  func.func @_sincere_kernel(%arg0: i32, %arg1: memref<8x128xf32, #tpu.memory_space<vmem>>, %arg2: memref<8x128xf32, #tpu.memory_space<vmem>>, %arg3: memref<8x1xi32, #tpu.memory_space<vmem>>, %arg4: memref<1x8xi32, #tpu.memory_space<vmem>>, %arg5: memref<1x8xf32, #tpu.memory_space<vmem>>, %arg6: memref<8x1xf32, #tpu.memory_space<vmem>>) attributes {dimension_semantics = [#tpu.dimension_semantics<parallel>], iteration_bounds = array<i64: 1>, scalar_prefetch = 0 : i64, scratch_operands = 0 : i64, tpu.core_type = #tpu.core_type<tc>, window_params = [{transform_indices = @transform_0, window_bounds = array<i64: 8, 128>}, {pipeline_mode = #tpu.pipeline_mode<synchronous>, transform_indices = @transform_1, window_bounds = array<i64: 8, 128>}, {transform_indices = @transform_2, window_bounds = array<i64: 8, 1>}, {pipeline_mode = #tpu.pipeline_mode<synchronous>, transform_indices = @transform_3, window_bounds = array<i64: 1, 8>}, {pipeline_mode = #tpu.pipeline_mode<synchronous>, transform_indices = @transform_4, window_bounds = array<i64: 1, 8>}, {transform_indices = @transform_5, window_bounds = array<i64: 8, 1>}]} {
    %c0 = arith.constant 0 : index
    %c0_0 = arith.constant 0 : index
    %0 = vector.load %arg1[%c0, %c0_0] : memref<8x128xf32, #tpu.memory_space<vmem>>, vector<8x128xf32>
    %cst = arith.constant 14.2857141 : f32
    %1 = vector.broadcast %cst : f32 to vector<8x128xf32>
    %2 = arith.mulf %0, %1 : vector<8x128xf32>
    %c0_1 = arith.constant 0 : index
    %c0_2 = arith.constant 0 : index
    %3 = vector.load %arg2[%c0_1, %c0_2] : memref<8x128xf32, #tpu.memory_space<vmem>>, vector<8x128xf32>
    %cst_3 = arith.constant dense<0.000000e+00> : vector<8x8xf32>
    %4 = tpu.matmul %2, %3, %cst_3 {dimension_numbers = #tpu.dot_dimension_numbers<[1], [1], [0], [0], [0, 0, 1, 0], [], []>} : vector<8x128xf32>, vector<8x128xf32>, vector<8x8xf32> -> vector<8x8xf32>
    %c0_4 = arith.constant 0 : index
    %c0_5 = arith.constant 0 : index
    %5 = vector.load %arg3[%c0_4, %c0_5] : memref<8x1xi32, #tpu.memory_space<vmem>>, vector<8x1xi32>
    %c0_6 = arith.constant 0 : index
    %c0_7 = arith.constant 0 : index
    %6 = vector.load %arg4[%c0_6, %c0_7] : memref<1x8xi32, #tpu.memory_space<vmem>>, vector<1x8xi32>
    %7 = vector.broadcast %5 : vector<8x1xi32> to vector<8x8xi32>
    %8 = vector.broadcast %6 : vector<1x8xi32> to vector<8x8xi32>
    %9 = arith.cmpi eq, %7, %8 : vector<8x8xi32>
    %cst_8 = arith.constant 0xFF800000 : f32
    %10 = vector.broadcast %cst_8 : f32 to vector<8x8xf32>
    %11 = arith.select %9, %10, %4 : vector<8x8xi1>, vector<8x8xf32>
    %cst_9 = arith.constant dense<0xFF800000> : vector<8xf32>
    %12 = vector.multi_reduction <maximumf>, %11, %cst_9 [1] : vector<8x8xf32> to vector<8xf32>
    %13 = vector.shape_cast %12 : vector<8xf32> to vector<8x1xf32>
    %cst_10 = arith.constant 0xFF800000 : f32
    %14 = vector.broadcast %cst_10 : f32 to vector<8x1xf32>
    %15 = arith.cmpf oeq, %13, %14 : vector<8x1xf32>
    %cst_11 = arith.constant 0.000000e+00 : f32
    %16 = vector.broadcast %cst_11 : f32 to vector<8x1xf32>
    %17 = arith.select %15, %16, %13 : vector<8x1xi1>, vector<8x1xf32>
    %18 = vector.broadcast %17 : vector<8x1xf32> to vector<8x8xf32>
    %19 = arith.subf %4, %18 : vector<8x8xf32>
    %20 = math.exp %19 : vector<8x8xf32>
    %cst_12 = arith.constant 0.000000e+00 : f32
    %21 = vector.broadcast %cst_12 : f32 to vector<8x8xf32>
    %22 = arith.select %9, %21, %20 : vector<8x8xi1>, vector<8x8xf32>
    %cst_13 = arith.constant dense<0.000000e+00> : vector<8xf32>
    %23 = vector.multi_reduction <add>, %22, %cst_13 [1] : vector<8x8xf32> to vector<8xf32>
    %24 = vector.shape_cast %23 : vector<8xf32> to vector<8x1xf32>
    %25 = vector.broadcast %24 : vector<8x1xf32> to vector<8x8xf32>
    %26 = arith.addf %20, %25 : vector<8x8xf32>
    %27 = math.log %26 : vector<8x8xf32>
    %28 = vector.broadcast %17 : vector<8x1xf32> to vector<8x8xf32>
    %29 = arith.addf %28, %27 : vector<8x8xf32>
    %30 = arith.subf %29, %4 : vector<8x8xf32>
    %c0_14 = arith.constant 0 : index
    %c0_15 = arith.constant 0 : index
    %31 = vector.load %arg5[%c0_14, %c0_15] : memref<1x8xf32, #tpu.memory_space<vmem>>, vector<1x8xf32>
    %cst_16 = arith.constant 0.000000e+00 : f32
    %32 = vector.shape_cast %31 : vector<1x8xf32> to vector<1x8xf32>
    %33 = vector.broadcast %32 : vector<1x8xf32> to vector<8x8xf32>
    %34 = vector.broadcast %cst_16 : f32 to vector<8x8xf32>
    %35 = arith.select %9, %33, %34 : vector<8x8xi1>, vector<8x8xf32>
    %36 = arith.mulf %35, %30 : vector<8x8xf32>
    %cst_17 = arith.constant dense<0.000000e+00> : vector<8xf32>
    %37 = vector.multi_reduction <add>, %36, %cst_17 [1] : vector<8x8xf32> to vector<8xf32>
    %38 = vector.shape_cast %37 : vector<8xf32> to vector<8x1xf32>
    %c0_18 = arith.constant 0 : index
    %c0_19 = arith.constant 0 : index
    %39 = vector.load %arg6[%c0_18, %c0_19] : memref<8x1xf32, #tpu.memory_space<vmem>>, vector<8x1xf32>
    tpu.vector_store %arg6[%c0_18, %c0_19], %38 {strides = array<i32>} : memref<8x1xf32, #tpu.memory_space<vmem>>, vector<8x1xf32>,
    return
  }
  func.func @transform_0(%arg0: i32) -> (i32, i32) {
    %c0_i32 = arith.constant 0 : i32
    %c0_i32_0 = arith.constant 0 : i32
    return %arg0, %c0_i32 : i32, i32
  }
  func.func @transform_1(%arg0: i32) -> (i32, i32) {
    %c0_i32 = arith.constant 0 : i32
    %c0_i32_0 = arith.constant 0 : i32
    %c0_i32_1 = arith.constant 0 : i32
    return %c0_i32, %c0_i32_0 : i32, i32
  }
  func.func @transform_2(%arg0: i32) -> (i32, i32) {
    %c0_i32 = arith.constant 0 : i32
    %c0_i32_0 = arith.constant 0 : i32
    return %arg0, %c0_i32 : i32, i32
  }
  func.func @transform_3(%arg0: i32) -> (i32, i32) {
    %c0_i32 = arith.constant 0 : i32
    %c0_i32_0 = arith.constant 0 : i32
    %c0_i32_1 = arith.constant 0 : i32
    return %c0_i32, %c0_i32_0 : i32, i32
  }
  func.func @transform_4(%arg0: i32) -> (i32, i32) {
    %c0_i32 = arith.constant 0 : i32
    %c0_i32_0 = arith.constant 0 : i32
    %c0_i32_1 = arith.constant 0 : i32
    return %c0_i32, %c0_i32_0 : i32, i32
  }
  func.func @transform_5(%arg0: i32) -> (i32, i32) {
    %c0_i32 = arith.constant 0 : i32
    %c0_i32_0 = arith.constant 0 : i32
    return %arg0, %c0_i32 : i32, i32
  }
}

</mosaic_0001>

<llo_original>
// kernel: tpu_custom_call.1
$region0: #{tpu_custom_call.1}
  #allocation0 [shape = 'u32[]', space=smem, size = 0x4, offset = 0x4, fixed_abs, tag = 'smem constant byte address 0x4 - core index']
  #allocation1 [shape = 'u32[144,128]{1,0:T(1,128)}', space=vmem, size = 0x12000, scoped, tag = 'internal scratch']
  %s0 = inlined_call_operand.vmem [shape: f32[8,128], index: 0, kind: input, shape index: {}]
  %s1 = inlined_call_operand.hbm [shape: f32[8,128], index: 1, kind: input, shape index: {}]
  %s2 = inlined_call_operand.vmem [shape: s32[8,1], index: 2, kind: input, shape index: {}]
  %s3 = inlined_call_operand.vmem [shape: s32[1,8], index: 3, kind: input, shape index: {}]
  %s4 = inlined_call_operand.vmem [shape: f32[1,8], index: 4, kind: input, shape index: {}]
  %s5 = inlined_call_operand.vmem [shape: f32[8,1], index: 5, kind: output, shape index: {}]
  %s6 = sld [smem:[#allocation0]]
  $region34: #{tpu_custom_call.1} parent=0
    _
  %s8 = ssub.s32 1, %s6
  %s9 = scalar_select 0, %s8, %s6
  $region1: #{tpu_custom_call.1} parent=0
    #allocation2 [shape = 'u8[4096]{0}', space=vmem, size = 0x1000, scoped, tag = 'input window, operand 1, single buffered']
    #allocation3 [shape = 's32[1]{0}', space=sflag, size = 0x4, scoped, tag = 'scoped memory for tpu_custom_call.1']
    %10 = vsyncpa [#allocation3], 0
    // Predicated region
    $region2: #{tpu_custom_call.1} parent=1 // pred_check
      _
    $region3: #{tpu_custom_call.1} parent=1 // pred_check_branch
      %12 = sbr.rel (0) target = $region5
    $region4: #{tpu_custom_call.1} parent=1 // pred_region
      _
    $region5: #{tpu_custom_call.1} parent=1 // pred_fallthru
      _
    // Predicated region
    $region6: #{tpu_custom_call.1} parent=1 // pred_check
      _
    $region7: #{tpu_custom_call.1} parent=1 // pred_check_branch
      %14 = sbr.rel (0) target = $region9
    $region8: #{tpu_custom_call.1} parent=1 // pred_region
      %s16 = ssub.s32 128, 128
      %17 = vsyncadd [#allocation3], %s16
      %s19 = sshll.u32 [#allocation2], 4
      %s20 = int_to_ptr.vmem [resolvable:$true] %s19
      %22 = dma.hbm_to_vmem [thread:$0]  %s1, 128, %s20, [#allocation3]
    $region9: #{tpu_custom_call.1} parent=1 // pred_fallthru
      _
    // Predicated region
    $region10: #{tpu_custom_call.1} parent=1 // pred_check
      _
    $region11: #{tpu_custom_call.1} parent=1 // pred_check_branch
      %24 = sbr.rel (0) target = $region13
    $region12: #{tpu_custom_call.1} parent=1 // pred_region
      _
    $region13: #{tpu_custom_call.1} parent=1 // pred_fallthru
      _
    // Predicated region
    $region14: #{tpu_custom_call.1} parent=1 // pred_check
      _
    $region15: #{tpu_custom_call.1} parent=1 // pred_check_branch
      %26 = sbr.rel (0) target = $region17
    $region16: #{tpu_custom_call.1} parent=1 // pred_region
      _
    $region17: #{tpu_custom_call.1} parent=1 // pred_fallthru
      _
    // Predicated region
    $region18: #{tpu_custom_call.1} parent=1 // pred_check
      _
    $region19: #{tpu_custom_call.1} parent=1 // pred_check_branch
      %28 = sbr.rel (0) target = $region21
    $region20: #{tpu_custom_call.1} parent=1 // pred_region
      _
    $region21: #{tpu_custom_call.1} parent=1 // pred_fallthru
      _
    // Predicated region
    $region22: #{tpu_custom_call.1} parent=1 // pred_check
      _
    $region23: #{tpu_custom_call.1} parent=1 // pred_check_branch
      %30 = sbr.rel (0) target = $region25
    $region24: #{tpu_custom_call.1} parent=1 // pred_region
      %31 = dma.done [#allocation3], 128
    $region25: #{tpu_custom_call.1} parent=1 // pred_fallthru
      _
    %v32 = vld [vmem:[%s0] sm:$0xff]
    %v33 = vmul.f32 %v32, 14.285714
    %v34 = vld [vmem:[#allocation2] sm:$0xff]
    %35 = vmatprep.subr.mxu0 0.0
    %36 = vmatpush1.xpose.msra.mxu0 0.0
    %37 = vmatprep.subr.mxu0 0.0
    %38 = vmatpush1.xpose.msra.mxu0 0.0
    %39 = vmatprep.subr.mxu0 0.0
    %40 = vmatpush1.xpose.msra.mxu0 0.0
    %41 = vmatprep.subr.mxu0 0.0
    %42 = vmatpush1.xpose.msra.mxu0 0.0
    %43 = vmatprep.subr.mxu0 0.0
    %44 = vmatpush1.xpose.msra.mxu0 0.0
    %45 = vmatprep.subr.mxu0 0.0
    %46 = vmatpush1.xpose.msra.mxu0 0.0
    %47 = vmatprep.subr.mxu0 0.0
    %48 = vmatpush1.xpose.msra.mxu0 0.0
    %49 = vmatprep.subr.mxu0 0.0
    %50 = vmatpush1.xpose.msra.mxu0 0.0
    %51 = vmatprep.subr.mxu0 0.0
    %52 = vmatpush1.xpose.msra.mxu0 0.0
    %53 = vmatprep.subr.mxu0 0.0
    %54 = vmatpush1.xpose.msra.mxu0 0.0
    %55 = vmatprep.subr.mxu0 0.0
    %56 = vmatpush1.xpose.msra.mxu0 0.0
    %57 = vmatprep.subr.mxu0 0.0
    %58 = vmatpush1.xpose.msra.mxu0 0.0
    %59 = vmatprep.subr.mxu0 0.0
    %60 = vmatpush1.xpose.msra.mxu0 0.0
    %61 = vmatprep.subr.mxu0 0.0
    %62 = vmatpush1.xpose.msra.mxu0 0.0
    %63 = vmatprep.subr.mxu0 0.0
    %64 = vmatpush1.xpose.msra.mxu0 0.0
    %65 = vmatprep.subr.mxu0 0.0
    %66 = vmatpush1.xpose.msra.mxu0 %v34
    %67 = vmatprep.subr.mxu0 0.0
    %68 = vmatpush2.xpose.msra.mxu0 0.0
    %69 = vmatprep.subr.mxu0 0.0
    %70 = vmatpush2.xpose.msra.mxu0 0.0
    %71 = vmatprep.subr.mxu0 0.0
    %72 = vmatpush2.xpose.msra.mxu0 0.0
    %73 = vmatprep.subr.mxu0 0.0
    %74 = vmatpush2.xpose.msra.mxu0 0.0
    %75 = vmatprep.subr.mxu0 0.0
    %76 = vmatpush2.xpose.msra.mxu0 0.0
    %77 = vmatprep.subr.mxu0 0.0
    %78 = vmatpush2.xpose.msra.mxu0 0.0
    %79 = vmatprep.subr.mxu0 0.0
    %80 = vmatpush2.xpose.msra.mxu0 0.0
    %81 = vmatprep.subr.mxu0 0.0
    %82 = vmatpush2.xpose.msra.mxu0 0.0
    %83 = vmatprep.subr.mxu0 0.0
    %84 = vmatpush2.xpose.msra.mxu0 0.0
    %85 = vmatprep.subr.mxu0 0.0
    %86 = vmatpush2.xpose.msra.mxu0 0.0
    %87 = vmatprep.subr.mxu0 0.0
    %88 = vmatpush2.xpose.msra.mxu0 0.0
    %89 = vmatprep.subr.mxu0 0.0
    %90 = vmatpush2.xpose.msra.mxu0 0.0
    %91 = vmatprep.subr.mxu0 0.0
    %92 = vmatpush2.xpose.msra.mxu0 0.0
    %93 = vmatprep.subr.mxu0 0.0
    %94 = vmatpush2.xpose.msra.mxu0 0.0
    %95 = vmatprep.subr.mxu0 0.0
    %96 = vmatpush2.xpose.msra.mxu0 0.0
    %97 = vmatprep.subr.mxu0 0.0
    %98 = vmatpush2.xpose.msra.mxu0 0.0
    %99 = vmatprep.mubr.f32.mxu0 0.0
    %100 = vmatmul.mubr.f32.gmra.mxu0 %v33
    %v101 = vpop.f32.mrf.mxu0
    %v102 = vadd.f32 0.0, %v101
    %v103 = vpop.f32.mrf.mxu0
    %104 = vdwg.mxu0
    %v105 = vld [vmem:[%s2] sm:$0xff]
    %v106 = vld [vmem:[%s3] sm:$0x1]
    %107 = vset.pattern.permute.xlu0 0
    %108 = vperm.xlu0 %107, %v105
    %v109 = vpop.permute.xlu0 %108
    %v110 = vlaneseq
    %v111 = vshrl.u32 %v110, 7
    %v112 = vsub.s32 0, %v111
    %v113 = vrot.slane %v106, %v112
    %vm114 = vcmp.eq.s32.totalorder %v109, %v113
    %v115 = vsel %vm114, -inf, %v102
    %vm116 = vcmask 64512
    %v117 = vsel %vm116, %v115, -inf
    %118 = vmax.xlane.f32.xlu0 %v117
    %v119 = vpop.xlane.xlu0 %118
    %vm120 = vcmp.eq.f32.partialorder %v119, -inf
    %v121 = vsel %vm120, 0.0, %v119
    %v122 = vsub.f32 %v102, %v121
    %v123 = vmul.f32 %v122, 1.442695
    %v124 = vpow.pop %v123
    %v125 = vsel %vm114, 0.0, %v124
    %v126 = vsel %vm116, %v125, 0.0
    %127 = vadd.xlane.f32.xlu0 %v126
    %v128 = vpop.xlane.xlu0 %127
    %v129 = vadd.f32 %v124, %v128
    %v130 = vlog2.pop %v129
    %v131 = vmul.f32 %v130, 0.6931472
    %v132 = vadd.f32 %v121, %v131
    %v133 = vsub.f32 %v132, %v102
    %v134 = vld [vmem:[%s4] sm:$0x1]
    %v136 = vlaneseq
    %v137 = vshrl.u32 %v136, 7
    %v138 = vsub.s32 0, %v137
    %v139 = vrot.slane %v134, %v138
    %v141 = vsel %vm114, %v139, 0.0
    %v142 = vmul.f32 %v141, %v133
    %v143 = vsel %vm116, %v142, 0.0
    %144 = vadd.xlane.f32.xlu0 %v143
    %v145 = vpop.xlane.xlu0 %144
    %vm146 = vcmask 7168
    %147 = vst.msk [vmem:[%s5] sm:$0xff] %vm146, %v145
    // Predicated region
    $region26: #{tpu_custom_call.1} parent=1 // pred_check
      _
    $region27: #{tpu_custom_call.1} parent=1 // pred_check_branch
      %149 = sbr.rel (0) target = $region29
    $region28: #{tpu_custom_call.1} parent=1 // pred_region
      _
    $region29: #{tpu_custom_call.1} parent=1 // pred_fallthru
      _
    // Predicated region
    $region30: #{tpu_custom_call.1} parent=1 // pred_check
      _
    $region31: #{tpu_custom_call.1} parent=1 // pred_check_branch
      %151 = sbr.rel (0) target = $region33
    $region32: #{tpu_custom_call.1} parent=1 // pred_region
      _
    $region33: #{tpu_custom_call.1} parent=1 // pred_fallthru
      _
    %152 = vsyncpa [#allocation3], 1

</llo_original>
